<compile_context>
chip_gen: v7x
topology: tpu7x:2x2x1
jax: 0.10.0
libtpu: 0.0.40
codegen_flags: <defaults>
</compile_context>

<pallas_src>
import functools

import jax
import jax.numpy as jnp
from jax.experimental import pallas as pl
from jax.experimental.pallas import tpu as pltpu

_SUBLANE = 8
_LANE = 128
_MIN_TILE = _SUBLANE * _LANE          # 1024 elems: layout granularity for the slab
_MAX_BLOCK_ROWS = 8192                # 8192 * 128 * 4 B = 4 MiB per input block


def _partial_sumsq_kernel(x_ref, t_ref, o_ref, *, block_rows, total_rows, needs_mask):
    """Per-grid-step partial sum of squared differences, folded to (8, 128)."""
    d = x_ref[...].astype(jnp.float32) - t_ref[...].astype(jnp.float32)
    sq = d * d
    if needs_mask:
        # Rows past `total_rows` in the last (partial) block hold undefined
        # data; zero them.  This branch is statically removed when the grid
        # divides evenly.
        row = (jax.lax.broadcasted_iota(jnp.int32, sq.shape, 0)
               + pl.program_id(0) * block_rows)
        sq = jnp.where(row < total_rows, sq, 0.0)
    # Fold (block_rows, 128) -> (8, 128) via a VPU-only reduction over the
    # leading (vreg-count) axis.  The expensive cross-lane reduce happens
    # exactly once, outside the kernel, on a tiny array.
    o_ref[...] = jnp.sum(
        sq.reshape(block_rows // _SUBLANE, _SUBLANE, _LANE), axis=0
    )[None]


def _flatten_2d(x):
    """Flatten to (rows, 128) with rows % 8 == 0; pad only if actually needed."""
    flat = x.reshape(-1)
    n = flat.shape[0]
    padded = ((n + _MIN_TILE - 1) // _MIN_TILE) * _MIN_TILE
    if padded != n:
        # Rare (non-multiple-of-1024 sizes). Zero pad in both operands -> diff 0.
        flat = jnp.pad(flat, (0, padded - n))
    return flat.reshape(-1, _LANE)


def content_loss_forward(x, target):
    """ContentLoss.forward: returns (input unchanged, mse_loss(input, target))."""
    assert x.shape == target.shape, "input/target shape mismatch"
    total_elems = x.size

    x2d = _flatten_2d(x)
    t2d = _flatten_2d(target)
    rows = x2d.shape[0]                       # static, multiple of 8

    block_rows = min(_MAX_BLOCK_ROWS, rows)   # multiple of 8, <= rows
    num_blocks = -(-rows // block_rows)       # cdiv
    needs_mask = (rows % block_rows) != 0

    kernel = functools.partial(
        _partial_sumsq_kernel,
        block_rows=block_rows,
        total_rows=rows,
        needs_mask=needs_mask,
    )

    partials = pl.pallas_call(
        kernel,
        out_shape=jax.ShapeDtypeStruct((num_blocks, _SUBLANE, _LANE), jnp.float32),
        grid_spec=pltpu.PrefetchScalarGridSpec(
            num_scalar_prefetch=0,
            grid=(num_blocks,),
            in_specs=[
                pl.BlockSpec((block_rows, _LANE), lambda i: (i, 0)),
                pl.BlockSpec((block_rows, _LANE), lambda i: (i, 0)),
            ],
            out_specs=pl.BlockSpec((1, _SUBLANE, _LANE), lambda i: (i, 0, 0)),
        ),
        compiler_params=pltpu.CompilerParams(
            dimension_semantics=("parallel",),        # no carried state -> megacore OK
            vmem_limit_bytes=32 * 1024 * 1024,
        ),
    )(x2d, t2d)

    # Tiny final reduce + mean (uses the true, unpadded element count).
    loss = jnp.sum(partials) / jnp.float32(total_elems)

    # forward() returns the input unchanged; `loss` is the module's `self.loss`.
    # TODO(synk): nn.Module stores `self.loss` as mutable state; here it is
    # returned as a second output instead.
    return x, loss


if __name__ == "__main__":
    key = jax.random.PRNGKey(0)
    kx, kt = jax.random.split(key)

    # Small NCHW feature map, consistent with a conv-feature ContentLoss.
    shape = (2, 4, 16, 16)
    x = jax.random.normal(kx, shape, dtype=jnp.float32)
    target = jax.random.normal(kt, shape, dtype=jnp.float32)  # "detached" target

    out, loss = jax.jit(content_loss_forward)(x, target)
    out, loss = jax.block_until_ready((out, loss))

    # Reference check (pure JAX).
    ref_loss = jnp.mean((x - target) ** 2)
    assert out.shape == x.shape and out.dtype == x.dtype
    assert jnp.allclose(out, x), "forward must return input unchanged"
    assert jnp.allclose(loss, ref_loss, rtol=1e-6, atol=1e-6), (loss, ref_loss)

    print("KERNEL_OK")
</pallas_src>

<mosaic_0001>
module attributes {stable_mosaic.version = 11 : i64} {
  func.func @_partial_sumsq_kernel(%arg0: i32, %arg1: memref<16x128xf32, #tpu.memory_space<vmem>>, %arg2: memref<16x128xf32, #tpu.memory_space<vmem>>, %arg3: memref<1x8x128xf32, #tpu.memory_space<vmem>>) attributes {dimension_semantics = [#tpu.dimension_semantics<parallel>], iteration_bounds = array<i64: 1>, scalar_prefetch = 0 : i64, scratch_operands = 0 : i64, tpu.core_type = #tpu.core_type<tc>, window_params = [{transform_indices = @transform_0, window_bounds = array<i64: 16, 128>}, {transform_indices = @transform_1, window_bounds = array<i64: 16, 128>}, {transform_indices = @transform_2, window_bounds = array<i64: 1, 8, 128>}]} {
    %c0 = arith.constant 0 : index
    %c0_0 = arith.constant 0 : index
    %0 = vector.load %arg1[%c0, %c0_0] : memref<16x128xf32, #tpu.memory_space<vmem>>, vector<16x128xf32>
    %c0_1 = arith.constant 0 : index
    %c0_2 = arith.constant 0 : index
    %1 = vector.load %arg2[%c0_1, %c0_2] : memref<16x128xf32, #tpu.memory_space<vmem>>, vector<16x128xf32>
    %2 = arith.subf %0, %1 : vector<16x128xf32>
    %3 = arith.mulf %2, %2 : vector<16x128xf32>
    %4 = vector.shape_cast %3 : vector<16x128xf32> to vector<2x8x128xf32>
    %cst = arith.constant dense<0.000000e+00> : vector<8x128xf32>
    %5 = vector.multi_reduction <add>, %4, %cst [0] : vector<2x8x128xf32> to vector<8x128xf32>
    %6 = vector.shape_cast %5 : vector<8x128xf32> to vector<1x8x128xf32>
    %c0_3 = arith.constant 0 : index
    %c0_4 = arith.constant 0 : index
    %c0_5 = arith.constant 0 : index
    %7 = vector.load %arg3[%c0_3, %c0_4, %c0_5] : memref<1x8x128xf32, #tpu.memory_space<vmem>>, vector<1x8x128xf32>
    tpu.vector_store %arg3[%c0_3, %c0_4, %c0_5], %6 {strides = array<i32>} : memref<1x8x128xf32, #tpu.memory_space<vmem>>, vector<1x8x128xf32>,
    return
  }
  func.func @transform_0(%arg0: i32) -> (i32, i32) {
    %c0_i32 = arith.constant 0 : i32
    %c0_i32_0 = arith.constant 0 : i32
    return %arg0, %c0_i32 : i32, i32
  }
  func.func @transform_1(%arg0: i32) -> (i32, i32) {
    %c0_i32 = arith.constant 0 : i32
    %c0_i32_0 = arith.constant 0 : i32
    return %arg0, %c0_i32 : i32, i32
  }
  func.func @transform_2(%arg0: i32) -> (i32, i32, i32) {
    %c0_i32 = arith.constant 0 : i32
    %c0_i32_0 = arith.constant 0 : i32
    %c0_i32_1 = arith.constant 0 : i32
    return %arg0, %c0_i32, %c0_i32_0 : i32, i32, i32
  }
}

</mosaic_0001>

<llo_original>
// kernel: content_loss_forward.1
$region0: #{content_loss_forward.1}
  #allocation0 [shape = 'u32[]', space=smem, size = 0x4, offset = 0x4, fixed_abs, tag = 'smem constant byte address 0x4 - core index']
  #allocation1 [shape = 'u32[144,128]{1,0:T(1,128)}', space=vmem, size = 0x12000, scoped, tag = 'internal scratch']
  %s0 = inlined_call_operand.vmem [shape: f32[16,128], index: 0, kind: input, shape index: {}]
  %s1 = inlined_call_operand.vmem [shape: f32[16,128], index: 1, kind: input, shape index: {}]
  %s2 = inlined_call_operand.vmem [shape: f32[1,8,128], index: 2, kind: output, shape index: {}]
  %s3 = sld [smem:[#allocation0]]
  $region18: #{content_loss_forward.1} parent=0
    _
  %s5 = ssub.s32 1, %s3
  %s6 = scalar_select 0, %s5, %s3
  // Predicated region
  $region2: #{content_loss_forward.1} parent=0 // pred_check
    _
  $region3: #{content_loss_forward.1} parent=0 // pred_check_branch
    %8 = sbr.rel (0) target = $region5
  $region4: #{content_loss_forward.1} parent=0 // pred_region
    _
  $region5: #{content_loss_forward.1} parent=0 // pred_fallthru
    _
  // Predicated region
  $region6: #{content_loss_forward.1} parent=0 // pred_check
    _
  $region7: #{content_loss_forward.1} parent=0 // pred_check_branch
    %10 = sbr.rel (0) target = $region9
  $region8: #{content_loss_forward.1} parent=0 // pred_region
    _
  $region9: #{content_loss_forward.1} parent=0 // pred_fallthru
    _
  %v11 = vld [vmem:[%s0] sm:$0xff]
  %v12 = vld [vmem:[%s0 + $0x8] sm:$0xff]
  %v13 = vld [vmem:[%s1] sm:$0xff]
  %v14 = vld [vmem:[%s1 + $0x8] sm:$0xff]
  %v15 = vsub.f32 %v11, %v13
  %v16 = vsub.f32 %v12, %v14
  %v17 = vmul.f32 %v15, %v15
  %v18 = vmul.f32 %v16, %v16
  %v19 = vadd.f32 %v17, %v18
  %20 = vst [vmem:[%s2] sm:$0xff] %v19
  // Predicated region
  $region10: #{content_loss_forward.1} parent=0 // pred_check
    _
  $region11: #{content_loss_forward.1} parent=0 // pred_check_branch
    %22 = sbr.rel (0) target = $region13
  $region12: #{content_loss_forward.1} parent=0 // pred_region
    _
  $region13: #{content_loss_forward.1} parent=0 // pred_fallthru
    _
  // Predicated region
  $region14: #{content_loss_forward.1} parent=0 // pred_check
    _
  $region15: #{content_loss_forward.1} parent=0 // pred_check_branch
    %24 = sbr.rel (0) target = $region17
  $region16: #{content_loss_forward.1} parent=0 // pred_region
    _
  $region17: #{content_loss_forward.1} parent=0 // pred_fallthru
    _

</llo_original>
